<compile_context>
chip_gen: v7x
topology: tpu7x:2x2x1
jax: 0.10.0
libtpu: 0.0.40
codegen_flags: <defaults>
</compile_context>

<pallas_src>
import functools

import jax
import jax.numpy as jnp
from jax.experimental import pallas as pl
from jax.experimental.pallas import tpu as pltpu


def _attn_mlp_kernel(ei_ref, ej_ref, w1_ref, w2_ref, b_ref, ua_ref, out_ref):
    # ei_ref/ej_ref: (tm_p, P*E)  packed activation rows (caller dtype), lane-dense
    # w1_ref/w2_ref: (P*E, P*A)   block-diagonal weights (resident, caller dtype)
    # b_ref:         (1,   P*A)   bias tiled P times (f32)
    # ua_ref:        (P*A, P)     block-structured ua (f32)
    # out_ref:       (tm_p, P)    packed scores (f32), contiguous with flat (N,)
    h = jnp.dot(ei_ref[...], w1_ref[...], preferred_element_type=jnp.float32)
    h = h + jnp.dot(ej_ref[...], w2_ref[...], preferred_element_type=jnp.float32)
    h = jnp.tanh(h + b_ref[...])                              # (tm_p, P*A) f32
    out_ref[...] = jnp.dot(h, ua_ref[...],
                           preferred_element_type=jnp.float32)


@functools.partial(jax.jit, static_argnames=("tm",))
def attention_mlp(e_i, e_j, wa_weight, wa_bias, ua, *, tm=8192):
    """e_i, e_j: (B, S, E).  wa_weight: (A, 2E), wa_bias: (A,), ua: (A,)."""
    B, S, E = e_i.shape
    A = ua.shape[0]
    N = B * S
    in_dtype = e_i.dtype
    itemsize = jnp.dtype(in_dtype).itemsize

    # Pack factor: fold P consecutive rows into one 128-lane row (free reshape).
    P = 128 // E if (E <= 128 and 128 % E == 0) else 1

    ei2 = e_i.reshape(N, E)
    ej2 = e_j.reshape(N, E)
    n_rows = N
    if N % P != 0:
        # TODO(synk): rare path (N not divisible by P) costs one extra HBM pass.
        pad = P - N % P
        ei2 = jnp.pad(ei2, ((0, pad), (0, 0)))
        ej2 = jnp.pad(ej2, ((0, pad), (0, 0)))
        n_rows = N + pad
    Np = n_rows // P                        # packed row count
    PE, PA = P * E, P * A

    # Free, contiguous views -- no data movement.
    ei_p = ei2.reshape(Np, PE)
    ej_p = ej2.reshape(Np, PE)

    # Tiny resident parameters, built once per call (~128x128 each).
    w1 = wa_weight[:, :E].T                 # (E, A)
    w2 = wa_weight[:, E:].T                 # (E, A)
    eye = jnp.eye(P, dtype=wa_weight.dtype)
    w1_bd = jnp.kron(eye, w1).astype(in_dtype)               # (PE, PA) block-diag
    w2_bd = jnp.kron(eye, w2).astype(in_dtype)               # (PE, PA) block-diag
    b_t = jnp.tile(wa_bias, P).reshape(1, PA).astype(jnp.float32)
    ua_blk = jnp.kron(eye, ua.reshape(A, 1)).astype(jnp.float32)   # (PA, P)

    # Row tile over packed rows; large to amortize per-step overhead, clamped
    # to the array for tiny inputs (block never exceeds the full array).
    tm_p = max(8, (tm // P // 8) * 8)       # sublane-aligned
    if Np <= tm_p:
        tm_p, num_tiles = Np, 1
    else:
        num_tiles = pl.cdiv(Np, tm_p)       # ragged last block is masked by Pallas

    cost = pl.CostEstimate(
        flops=4 * N * E * A + 2 * N * A,
        transcendentals=N * A,
        bytes_accessed=2 * N * E * itemsize + N * 4
                       + 2 * PE * PA * itemsize + PA * 4 * (P + 1))

    out = pl.pallas_call(
        _attn_mlp_kernel,
        out_shape=jax.ShapeDtypeStruct((Np, P), jnp.float32),
        grid_spec=pltpu.PrefetchScalarGridSpec(
            num_scalar_prefetch=0,
            grid=(num_tiles,),
            in_specs=[
                # Streamed, lane-dense activation tiles.
                pl.BlockSpec((tm_p, PE), lambda i: (i, 0)),
                pl.BlockSpec((tm_p, PE), lambda i: (i, 0)),
                # Resident parameters (same block every step -> fetched once).
                pl.BlockSpec((PE, PA), lambda i: (0, 0)),
                pl.BlockSpec((PE, PA), lambda i: (0, 0)),
                pl.BlockSpec((1, PA), lambda i: (0, 0)),
                pl.BlockSpec((PA, P), lambda i: (0, 0)),
            ],
            out_specs=pl.BlockSpec((tm_p, P), lambda i: (i, 0)),
        ),
        compiler_params=pltpu.CompilerParams(
            dimension_semantics=("parallel",)),
        cost_estimate=cost,
    )(ei_p, ej_p, w1_bd, w2_bd, b_t, ua_blk)

    # (Np, P) is a contiguous view of the flat (N,) scores.
    return out.reshape(n_rows)[:N].reshape(B, S)


def _reference(e_i, e_j, wa_weight, wa_bias, ua):
    combined = jnp.concatenate([e_i, e_j], axis=-1)
    h = jnp.tanh(combined @ wa_weight.T + wa_bias)
    return h @ ua


if __name__ == "__main__":
    # Small shapes consistent with the module: batch=2, seq=8, emb_dim=32, attn_dim=32.
    B, S, E, A = 2, 8, 32, 32

    key = jax.random.PRNGKey(0)
    k1, k2, k3, k4, k5 = jax.random.split(key, 5)

    e_i = jax.random.normal(k1, (B, S, E), dtype=jnp.float32)
    e_j = jax.random.normal(k2, (B, S, E), dtype=jnp.float32)

    # Params with shapes from nn.Linear(2E, A) and Parameter(randn(A)).
    wa_weight = jax.random.normal(k3, (A, 2 * E), dtype=jnp.float32) / jnp.sqrt(2.0 * E)
    wa_bias = jax.random.normal(k4, (A,), dtype=jnp.float32) * 0.01
    ua = jax.random.normal(k5, (A,), dtype=jnp.float32)

    ref = _reference(e_i, e_j, wa_weight, wa_bias, ua)

    # f32 path (caller dtype streamed as-is): tight numerical check.
    out_f32 = jax.block_until_ready(attention_mlp(e_i, e_j, wa_weight, wa_bias, ua))
    assert out_f32.shape == (B, S)
    assert jnp.allclose(out_f32, ref, atol=1e-3, rtol=1e-3), "f32 mismatch vs reference"

    # bf16 streaming path: the producer supplies bf16 activations (no wrapper
    # cast pass); looser tolerance by design.
    out_bf16 = jax.block_until_ready(
        attention_mlp(e_i.astype(jnp.bfloat16), e_j.astype(jnp.bfloat16),
                      wa_weight, wa_bias, ua))
    assert out_bf16.shape == (B, S)
    assert jnp.allclose(out_bf16, ref, atol=1e-1, rtol=1e-1), "bf16 mismatch vs reference"

    print("KERNEL_OK")
</pallas_src>

<mosaic_0001>
module attributes {stable_mosaic.version = 11 : i64} {
  func.func @_attn_mlp_kernel(%arg0: i32, %arg1: memref<4x128xf32, #tpu.memory_space<vmem>>, %arg2: memref<4x128xf32, #tpu.memory_space<vmem>>, %arg3: memref<128x128xf32, #tpu.memory_space<vmem>>, %arg4: memref<128x128xf32, #tpu.memory_space<vmem>>, %arg5: memref<1x128xf32, #tpu.memory_space<vmem>>, %arg6: memref<128x4xf32, #tpu.memory_space<vmem>>, %arg7: memref<4x4xf32, #tpu.memory_space<vmem>>) attributes {dimension_semantics = [#tpu.dimension_semantics<parallel>], iteration_bounds = array<i64: 1>, scalar_prefetch = 0 : i64, scratch_operands = 0 : i64, tpu.core_type = #tpu.core_type<tc>, window_params = [{transform_indices = @transform_0, window_bounds = array<i64: 4, 128>}, {transform_indices = @transform_1, window_bounds = array<i64: 4, 128>}, {pipeline_mode = #tpu.pipeline_mode<synchronous>, transform_indices = @transform_2, window_bounds = array<i64: 128, 128>}, {pipeline_mode = #tpu.pipeline_mode<synchronous>, transform_indices = @transform_3, window_bounds = array<i64: 128, 128>}, {pipeline_mode = #tpu.pipeline_mode<synchronous>, transform_indices = @transform_4, window_bounds = array<i64: 1, 128>}, {pipeline_mode = #tpu.pipeline_mode<synchronous>, transform_indices = @transform_5, window_bounds = array<i64: 128, 4>}, {transform_indices = @transform_6, window_bounds = array<i64: 4, 4>}]} {
    %c0 = arith.constant 0 : index
    %c0_0 = arith.constant 0 : index
    %0 = vector.load %arg1[%c0, %c0_0] : memref<4x128xf32, #tpu.memory_space<vmem>>, vector<4x128xf32>
    %c0_1 = arith.constant 0 : index
    %c0_2 = arith.constant 0 : index
    %1 = vector.load %arg3[%c0_1, %c0_2] : memref<128x128xf32, #tpu.memory_space<vmem>>, vector<128x128xf32>
    %cst = arith.constant dense<0.000000e+00> : vector<4x128xf32>
    %2 = tpu.matmul %0, %1, %cst {dimension_numbers = #tpu.dot_dimension_numbers<[1], [0], [0], [1], [0, 0, 1, 1], [], []>} : vector<4x128xf32>, vector<128x128xf32>, vector<4x128xf32> -> vector<4x128xf32>
    %c0_3 = arith.constant 0 : index
    %c0_4 = arith.constant 0 : index
    %3 = vector.load %arg2[%c0_3, %c0_4] : memref<4x128xf32, #tpu.memory_space<vmem>>, vector<4x128xf32>
    %c0_5 = arith.constant 0 : index
    %c0_6 = arith.constant 0 : index
    %4 = vector.load %arg4[%c0_5, %c0_6] : memref<128x128xf32, #tpu.memory_space<vmem>>, vector<128x128xf32>
    %cst_7 = arith.constant dense<0.000000e+00> : vector<4x128xf32>
    %5 = tpu.matmul %3, %4, %cst_7 {dimension_numbers = #tpu.dot_dimension_numbers<[1], [0], [0], [1], [0, 0, 1, 1], [], []>} : vector<4x128xf32>, vector<128x128xf32>, vector<4x128xf32> -> vector<4x128xf32>
    %6 = arith.addf %2, %5 : vector<4x128xf32>
    %c0_8 = arith.constant 0 : index
    %c0_9 = arith.constant 0 : index
    %7 = vector.load %arg5[%c0_8, %c0_9] : memref<1x128xf32, #tpu.memory_space<vmem>>, vector<1x128xf32>
    %8 = vector.broadcast %7 : vector<1x128xf32> to vector<4x128xf32>
    %9 = arith.addf %6, %8 : vector<4x128xf32>
    %10 = math.tanh %9 : vector<4x128xf32>
    %c0_10 = arith.constant 0 : index
    %c0_11 = arith.constant 0 : index
    %11 = vector.load %arg6[%c0_10, %c0_11] : memref<128x4xf32, #tpu.memory_space<vmem>>, vector<128x4xf32>
    %cst_12 = arith.constant dense<0.000000e+00> : vector<4x4xf32>
    %12 = tpu.matmul %10, %11, %cst_12 {dimension_numbers = #tpu.dot_dimension_numbers<[1], [0], [0], [1], [0, 0, 1, 1], [], []>} : vector<4x128xf32>, vector<128x4xf32>, vector<4x4xf32> -> vector<4x4xf32>
    %c0_13 = arith.constant 0 : index
    %c0_14 = arith.constant 0 : index
    %13 = vector.load %arg7[%c0_13, %c0_14] : memref<4x4xf32, #tpu.memory_space<vmem>>, vector<4x4xf32>
    tpu.vector_store %arg7[%c0_13, %c0_14], %12 {strides = array<i32>} : memref<4x4xf32, #tpu.memory_space<vmem>>, vector<4x4xf32>,
    return
  }
  func.func @transform_0(%arg0: i32) -> (i32, i32) {
    %c0_i32 = arith.constant 0 : i32
    %c0_i32_0 = arith.constant 0 : i32
    return %arg0, %c0_i32 : i32, i32
  }
  func.func @transform_1(%arg0: i32) -> (i32, i32) {
    %c0_i32 = arith.constant 0 : i32
    %c0_i32_0 = arith.constant 0 : i32
    return %arg0, %c0_i32 : i32, i32
  }
  func.func @transform_2(%arg0: i32) -> (i32, i32) {
    %c0_i32 = arith.constant 0 : i32
    %c0_i32_0 = arith.constant 0 : i32
    %c0_i32_1 = arith.constant 0 : i32
    return %c0_i32, %c0_i32_0 : i32, i32
  }
  func.func @transform_3(%arg0: i32) -> (i32, i32) {
    %c0_i32 = arith.constant 0 : i32
    %c0_i32_0 = arith.constant 0 : i32
    %c0_i32_1 = arith.constant 0 : i32
    return %c0_i32, %c0_i32_0 : i32, i32
  }
  func.func @transform_4(%arg0: i32) -> (i32, i32) {
    %c0_i32 = arith.constant 0 : i32
    %c0_i32_0 = arith.constant 0 : i32
    %c0_i32_1 = arith.constant 0 : i32
    return %c0_i32, %c0_i32_0 : i32, i32
  }
  func.func @transform_5(%arg0: i32) -> (i32, i32) {
    %c0_i32 = arith.constant 0 : i32
    %c0_i32_0 = arith.constant 0 : i32
    %c0_i32_1 = arith.constant 0 : i32
    return %c0_i32, %c0_i32_0 : i32, i32
  }
  func.func @transform_6(%arg0: i32) -> (i32, i32) {
    %c0_i32 = arith.constant 0 : i32
    %c0_i32_0 = arith.constant 0 : i32
    return %arg0, %c0_i32 : i32, i32
  }
}

</mosaic_0001>

<llo_original>
// kernel: tile.9
$region0: #{tile.9}
  %s0 = inlined_call_operand.vmem [shape: f32[4,32], index: 0, kind: input, shape index: {}]
  %s1 = inlined_call_operand.vmem [shape: f32[1,128], index: 1, kind: output, shape index: {}]
  $region1: #{tile.9} parent=0
    #allocation0 [shape = 'u8[4096]{0}', space=vmem, size = 0x1000, scoped, tag = 'scoped mem for output reshape']
    #allocation1 [shape = 'u8[4096]{0}', space=vmem, size = 0x1000, scoped, tag = 'scoped mem for input reshape']
    %s3 = sshllo.u32 0, 4
    %v4 = vld [vmem:[%s0] sm:%s3]
    %5 = vst [vmem:[#allocation1] sm:%s3] %v4
    %v6 = vld [vmem:[#allocation1] sm:$0x1]
    %vm7 = vcmask 261120
    %8 = vst.msk [vmem:[#allocation0] sm:$0x1] %vm7, %v6
    %s9 = scalar_lea.vmem [#allocation1], 3
    %v10 = vld [vmem:[%s9] sm:$0x1]
    %11 = vrot.lane.b32.xlu0 %v10, 96
    %v12 = vpop.permute.xlu0 %11
    %vm13 = vcmask 1048320
    %14 = vst.msk [vmem:[#allocation0] sm:$0x1] %vm13, %v12
    %s15 = scalar_lea.vmem [#allocation1], 2
    %v16 = vld [vmem:[%s15] sm:$0x1]
    %17 = vrot.lane.b32.xlu0 %v16, 64
    %v18 = vpop.permute.xlu0 %17
    %vm19 = vcmask 785920
    %20 = vst.msk [vmem:[#allocation0] sm:$0x1] %vm19, %v18
    %s21 = scalar_lea.vmem [#allocation1], 1
    %v22 = vld [vmem:[%s21] sm:$0x1]
    %23 = vrot.lane.b32.xlu0 %v22, 32
    %v24 = vpop.permute.xlu0 %23
    %vm25 = vcmask 523520
    %26 = vst.msk [vmem:[#allocation0] sm:$0x1] %vm25, %v24
    %s28 = sshllo.u32 0, 1
    %v30 = vld [vmem:[#allocation0] sm:%s28]
    %s31 = sshllo.u32 0, 1
    %32 = vst [vmem:[%s1] sm:%s31] %v30

// kernel: attention_mlp.1
$region0: #{attention_mlp.1}
  #allocation0 [shape = 'u32[]', space=smem, size = 0x4, offset = 0x4, fixed_abs, tag = 'smem constant byte address 0x4 - core index']
  #allocation1 [shape = 'u32[144,128]{1,0:T(1,128)}', space=vmem, size = 0x12000, scoped, tag = 'internal scratch']
  %s0 = inlined_call_operand.vmem [shape: f32[4,128], index: 0, kind: input, shape index: {}]
  %s1 = inlined_call_operand.vmem [shape: f32[4,128], index: 1, kind: input, shape index: {}]
  %s2 = inlined_call_operand.vmem [shape: f32[128,128], index: 2, kind: input, shape index: {}]
  %s3 = inlined_call_operand.vmem [shape: f32[128,128], index: 3, kind: input, shape index: {}]
  %s4 = inlined_call_operand.vmem [shape: f32[1,128], index: 4, kind: input, shape index: {}]
  %s5 = inlined_call_operand.vmem [shape: f32[128,4], index: 5, kind: input, shape index: {}]
  %s6 = inlined_call_operand.vmem [shape: f32[4,4], index: 6, kind: output, shape index: {}]
  %s7 = sld [smem:[#allocation0]]
  $region34: #{attention_mlp.1} parent=0
    _
  %s9 = ssub.s32 1, %s7
  %s10 = scalar_select 0, %s9, %s7
  // Predicated region
  $region2: #{attention_mlp.1} parent=0 // pred_check
    _
  $region3: #{attention_mlp.1} parent=0 // pred_check_branch
    %12 = sbr.rel (0) target = $region5
  $region4: #{attention_mlp.1} parent=0 // pred_region
    _
  $region5: #{attention_mlp.1} parent=0 // pred_fallthru
    _
  // Predicated region
  $region6: #{attention_mlp.1} parent=0 // pred_check
    _
  $region7: #{attention_mlp.1} parent=0 // pred_check_branch
    %14 = sbr.rel (0) target = $region9
  $region8: #{attention_mlp.1} parent=0 // pred_region
    _
  $region9: #{attention_mlp.1} parent=0 // pred_fallthru
    _
  // Predicated region
  $region10: #{attention_mlp.1} parent=0 // pred_check
    _
  $region11: #{attention_mlp.1} parent=0 // pred_check_branch
    %16 = sbr.rel (0) target = $region13
  $region12: #{attention_mlp.1} parent=0 // pred_region
    _
  $region13: #{attention_mlp.1} parent=0 // pred_fallthru
    _
  // Predicated region
  $region14: #{attention_mlp.1} parent=0 // pred_check
    _
  $region15: #{attention_mlp.1} parent=0 // pred_check_branch
    %18 = sbr.rel (0) target = $region17
  $region16: #{attention_mlp.1} parent=0 // pred_region
    _
  $region17: #{attention_mlp.1} parent=0 // pred_fallthru
    _
  // Predicated region
  $region18: #{attention_mlp.1} parent=0 // pred_check
    _
  $region19: #{attention_mlp.1} parent=0 // pred_check_branch
    %20 = sbr.rel (0) target = $region21
  $region20: #{attention_mlp.1} parent=0 // pred_region
    _
  $region21: #{attention_mlp.1} parent=0 // pred_fallthru
    _
  // Predicated region
  $region22: #{attention_mlp.1} parent=0 // pred_check
    _
  $region23: #{attention_mlp.1} parent=0 // pred_check_branch
    %22 = sbr.rel (0) target = $region25
  $region24: #{attention_mlp.1} parent=0 // pred_region
    _
  $region25: #{attention_mlp.1} parent=0 // pred_fallthru
    _
  %v23 = vld [vmem:[%s0] sm:$0xf]
  %v24 = vld [vmem:[%s2] sm:$0xff]
  %v25 = vld [vmem:[%s2 + $0x8] sm:$0xff]
  %v26 = vld [vmem:[%s2 + $0x10] sm:$0xff]
  %v27 = vld [vmem:[%s2 + $0x18] sm:$0xff]
  %v28 = vld [vmem:[%s2 + $0x20] sm:$0xff]
  %v29 = vld [vmem:[%s2 + $0x28] sm:$0xff]
  %v30 = vld [vmem:[%s2 + $0x30] sm:$0xff]
  %v31 = vld [vmem:[%s2 + $0x38] sm:$0xff]
  %v32 = vld [vmem:[%s2 + $0x40] sm:$0xff]
  %v33 = vld [vmem:[%s2 + $0x48] sm:$0xff]
  %v34 = vld [vmem:[%s2 + $0x50] sm:$0xff]
  %v35 = vld [vmem:[%s2 + $0x58] sm:$0xff]
  %v36 = vld [vmem:[%s2 + $0x60] sm:$0xff]
  %v37 = vld [vmem:[%s2 + $0x68] sm:$0xff]
  %v38 = vld [vmem:[%s2 + $0x70] sm:$0xff]
  %v39 = vld [vmem:[%s2 + $0x78] sm:$0xff]
  %v40 = vld [vmem:[%s1] sm:$0xf]
  %v41 = vld [vmem:[%s3] sm:$0xff]
  %v42 = vld [vmem:[%s3 + $0x8] sm:$0xff]
  %v43 = vld [vmem:[%s3 + $0x10] sm:$0xff]
  %v44 = vld [vmem:[%s3 + $0x18] sm:$0xff]
  %v45 = vld [vmem:[%s3 + $0x20] sm:$0xff]
  %v46 = vld [vmem:[%s3 + $0x28] sm:$0xff]
  %v47 = vld [vmem:[%s3 + $0x30] sm:$0xff]
  %v48 = vld [vmem:[%s3 + $0x38] sm:$0xff]
  %v49 = vld [vmem:[%s3 + $0x40] sm:$0xff]
  %v50 = vld [vmem:[%s3 + $0x48] sm:$0xff]
  %v51 = vld [vmem:[%s3 + $0x50] sm:$0xff]
  %v52 = vld [vmem:[%s3 + $0x58] sm:$0xff]
  %v53 = vld [vmem:[%s3 + $0x60] sm:$0xff]
  %v54 = vld [vmem:[%s3 + $0x68] sm:$0xff]
  %v55 = vld [vmem:[%s3 + $0x70] sm:$0xff]
  %v56 = vld [vmem:[%s3 + $0x78] sm:$0xff]
  %57 = vmatprep.subr.mxu0 0.0
  %58 = vmatpush1.msra.mxu0 %v41
  %59 = vmatprep.subr.mxu0 0.0
  %60 = vmatpush1.msra.mxu0 %v42
  %61 = vmatprep.subr.mxu0 0.0
  %62 = vmatpush1.msra.mxu0 %v43
  %63 = vmatprep.subr.mxu0 0.0
  %64 = vmatpush1.msra.mxu0 %v44
  %65 = vmatprep.subr.mxu0 0.0
  %66 = vmatpush1.msra.mxu0 %v45
  %67 = vmatprep.subr.mxu0 0.0
  %68 = vmatpush1.msra.mxu0 %v46
  %69 = vmatprep.subr.mxu0 0.0
  %70 = vmatpush1.msra.mxu0 %v47
  %71 = vmatprep.subr.mxu0 0.0
  %72 = vmatpush1.msra.mxu0 %v48
  %73 = vmatprep.subr.mxu0 0.0
  %74 = vmatpush1.msra.mxu0 %v49
  %75 = vmatprep.subr.mxu0 0.0
  %76 = vmatpush1.msra.mxu0 %v50
  %77 = vmatprep.subr.mxu0 0.0
  %78 = vmatpush1.msra.mxu0 %v51
  %79 = vmatprep.subr.mxu0 0.0
  %80 = vmatpush1.msra.mxu0 %v52
  %81 = vmatprep.subr.mxu0 0.0
  %82 = vmatpush1.msra.mxu0 %v53
  %83 = vmatprep.subr.mxu0 0.0
  %84 = vmatpush1.msra.mxu0 %v54
  %85 = vmatprep.subr.mxu0 0.0
  %86 = vmatpush1.msra.mxu0 %v55
  %87 = vmatprep.subr.mxu0 0.0
  %88 = vmatpush1.msra.mxu0 %v56
  %89 = vmatprep.subr.mxu0 0.0
  %90 = vmatpush1.msra.mxu0 0.0
  %91 = vmatprep.subr.mxu0 0.0
  %92 = vmatpush1.msra.mxu0 0.0
  %93 = vmatprep.subr.mxu0 0.0
  %94 = vmatpush1.msra.mxu0 0.0
  %95 = vmatprep.subr.mxu0 0.0
  %96 = vmatpush1.msra.mxu0 0.0
  %97 = vmatprep.subr.mxu0 0.0
  %98 = vmatpush1.msra.mxu0 0.0
  %99 = vmatprep.subr.mxu0 0.0
  %100 = vmatpush1.msra.mxu0 0.0
  %101 = vmatprep.subr.mxu0 0.0
  %102 = vmatpush1.msra.mxu0 0.0
  %103 = vmatprep.subr.mxu0 0.0
  %104 = vmatpush1.msra.mxu0 0.0
  %105 = vmatprep.subr.mxu0 0.0
  %106 = vmatpush1.msra.mxu0 0.0
  %107 = vmatprep.subr.mxu0 0.0
  %108 = vmatpush1.msra.mxu0 0.0
  %109 = vmatprep.subr.mxu0 0.0
  %110 = vmatpush1.msra.mxu0 0.0
  %111 = vmatprep.subr.mxu0 0.0
  %112 = vmatpush1.msra.mxu0 0.0
  %113 = vmatprep.subr.mxu0 0.0
  %114 = vmatpush1.msra.mxu0 0.0
  %115 = vmatprep.subr.mxu0 0.0
  %116 = vmatpush1.msra.mxu0 0.0
  %117 = vmatprep.subr.mxu0 0.0
  %118 = vmatpush1.msra.mxu0 0.0
  %119 = vmatprep.subr.mxu0 0.0
  %120 = vmatpush1.msra.mxu0 0.0
  %121 = vmatprep.mubr.f32.mxu0 0.0
  %122 = vmatmul.mubr.f32.gmra.mrb[0].mxu0 %v40
  %v123 = vpop.f32.mrb[0].mxu0
  %v124 = vadd.f32 0.0, %v123
  %v125 = vpop.f32.mrb[0].mxu0
  %126 = vdwg.mxu0
  %127 = vmatprep.subr.mxu0 0.0
  %128 = vmatpush1.msra.mxu0 %v24
  %129 = vmatprep.subr.mxu0 0.0
  %130 = vmatpush1.msra.mxu0 %v25
  %131 = vmatprep.subr.mxu0 0.0
  %132 = vmatpush1.msra.mxu0 %v26
  %133 = vmatprep.subr.mxu0 0.0
  %134 = vmatpush1.msra.mxu0 %v27
  %135 = vmatprep.subr.mxu0 0.0
  %136 = vmatpush1.msra.mxu0 %v28
  %137 = vmatprep.subr.mxu0 0.0
  %138 = vmatpush1.msra.mxu0 %v29
  %139 = vmatprep.subr.mxu0 0.0
  %140 = vmatpush1.msra.mxu0 %v30
  %141 = vmatprep.subr.mxu0 0.0
  %142 = vmatpush1.msra.mxu0 %v31
  %143 = vmatprep.subr.mxu0 0.0
  %144 = vmatpush1.msra.mxu0 %v32
  %145 = vmatprep.subr.mxu0 0.0
  %146 = vmatpush1.msra.mxu0 %v33
  %147 = vmatprep.subr.mxu0 0.0
  %148 = vmatpush1.msra.mxu0 %v34
  %149 = vmatprep.subr.mxu0 0.0
  %150 = vmatpush1.msra.mxu0 %v35
  %151 = vmatprep.subr.mxu0 0.0
  %152 = vmatpush1.msra.mxu0 %v36
  %153 = vmatprep.subr.mxu0 0.0
  %154 = vmatpush1.msra.mxu0 %v37
  %155 = vmatprep.subr.mxu0 0.0
  %156 = vmatpush1.msra.mxu0 %v38
  %157 = vmatprep.subr.mxu0 0.0
  %158 = vmatpush1.msra.mxu0 %v39
  %159 = vmatprep.subr.mxu0 0.0
  %160 = vmatpush1.msra.mxu0 0.0
  %161 = vmatprep.subr.mxu0 0.0
  %162 = vmatpush1.msra.mxu0 0.0
  %163 = vmatprep.subr.mxu0 0.0
  %164 = vmatpush1.msra.mxu0 0.0
  %165 = vmatprep.subr.mxu0 0.0
  %166 = vmatpush1.msra.mxu0 0.0
  %167 = vmatprep.subr.mxu0 0.0
  %168 = vmatpush1.msra.mxu0 0.0
  %169 = vmatprep.subr.mxu0 0.0
  %170 = vmatpush1.msra.mxu0 0.0
  %171 = vmatprep.subr.mxu0 0.0
  %172 = vmatpush1.msra.mxu0 0.0
  %173 = vmatprep.subr.mxu0 0.0
  %174 = vmatpush1.msra.mxu0 0.0
  %175 = vmatprep.subr.mxu0 0.0
  %176 = vmatpush1.msra.mxu0 0.0
  %177 = vmatprep.subr.mxu0 0.0
  %178 = vmatpush1.msra.mxu0 0.0
  %179 = vmatprep.subr.mxu0 0.0
  %180 = vmatpush1.msra.mxu0 0.0
  %181 = vmatprep.subr.mxu0 0.0
  %182 = vmatpush1.msra.mxu0 0.0
  %183 = vmatprep.subr.mxu0 0.0
  %184 = vmatpush1.msra.mxu0 0.0
  %185 = vmatprep.subr.mxu0 0.0
  %186 = vmatpush1.msra.mxu0 0.0
  %187 = vmatprep.subr.mxu0 0.0
  %188 = vmatpush1.msra.mxu0 0.0
  %189 = vmatprep.subr.mxu0 0.0
  %190 = vmatpush1.msra.mxu0 0.0
  %191 = vmatprep.mubr.f32.mxu0 0.0
  %192 = vmatmul.mubr.f32.gmra.mrb[0].mxu0 %v23
  %v193 = vpop.f32.mrb[0].mxu0
  %v194 = vadd.f32 %v124, %v193
  %v195 = vpop.f32.mrb[0].mxu0
  %196 = vdwg.mxu0
  %v197 = vld [vmem:[%s4] sm:$0x1]
  %v199 = vlaneseq
  %v200 = vshrl.u32 %v199, 7
  %v201 = vsub.s32 0, %v200
  %v202 = vrot.slane %v197, %v201
  %v204 = vadd.f32 %v194, %v202
  %v205 = vtanh.pop %v204
  %v206 = vld [vmem:[%s5] sm:$0xff]
  %v207 = vld [vmem:[%s5 + $0x8] sm:$0xff]
  %v208 = vld [vmem:[%s5 + $0x10] sm:$0xff]
  %v209 = vld [vmem:[%s5 + $0x18] sm:$0xff]
  %v210 = vld [vmem:[%s5 + $0x20] sm:$0xff]
  %v211 = vld [vmem:[%s5 + $0x28] sm:$0xff]
  %v212 = vld [vmem:[%s5 + $0x30] sm:$0xff]
  %v213 = vld [vmem:[%s5 + $0x38] sm:$0xff]
  %v214 = vld [vmem:[%s5 + $0x40] sm:$0xff]
  %v215 = vld [vmem:[%s5 + $0x48] sm:$0xff]
  %v216 = vld [vmem:[%s5 + $0x50] sm:$0xff]
  %v217 = vld [vmem:[%s5 + $0x58] sm:$0xff]
  %v218 = vld [vmem:[%s5 + $0x60] sm:$0xff]
  %v219 = vld [vmem:[%s5 + $0x68] sm:$0xff]
  %v220 = vld [vmem:[%s5 + $0x70] sm:$0xff]
  %v221 = vld [vmem:[%s5 + $0x78] sm:$0xff]
  %222 = vmatprep.subr.mxu0 0.0
  %223 = vmatpush1.msra.mxu0 %v206
  %224 = vmatprep.subr.mxu0 0.0
  %225 = vmatpush1.msra.mxu0 %v207
  %226 = vmatprep.subr.mxu0 0.0
  %227 = vmatpush1.msra.mxu0 %v208
  %228 = vmatprep.subr.mxu0 0.0
  %229 = vmatpush1.msra.mxu0 %v209
  %230 = vmatprep.subr.mxu0 0.0
  %231 = vmatpush1.msra.mxu0 %v210
  %232 = vmatprep.subr.mxu0 0.0
  %233 = vmatpush1.msra.mxu0 %v211
  %234 = vmatprep.subr.mxu0 0.0
  %235 = vmatpush1.msra.mxu0 %v212
  %236 = vmatprep.subr.mxu0 0.0
  %237 = vmatpush1.msra.mxu0 %v213
  %238 = vmatprep.subr.mxu0 0.0
  %239 = vmatpush1.msra.mxu0 %v214
  %240 = vmatprep.subr.mxu0 0.0
  %241 = vmatpush1.msra.mxu0 %v215
  %242 = vmatprep.subr.mxu0 0.0
  %243 = vmatpush1.msra.mxu0 %v216
  %244 = vmatprep.subr.mxu0 0.0
  %245 = vmatpush1.msra.mxu0 %v217
  %246 = vmatprep.subr.mxu0 0.0
  %247 = vmatpush1.msra.mxu0 %v218
  %248 = vmatprep.subr.mxu0 0.0
  %249 = vmatpush1.msra.mxu0 %v219
  %250 = vmatprep.subr.mxu0 0.0
  %251 = vmatpush1.msra.mxu0 %v220
  %252 = vmatprep.subr.mxu0 0.0
  %253 = vmatpush1.msra.mxu0 %v221
  %254 = vmatprep.subr.mxu0 0.0
  %255 = vmatpush1.msra.mxu0 0.0
  %256 = vmatprep.subr.mxu0 0.0
  %257 = vmatpush1.msra.mxu0 0.0
  %258 = vmatprep.subr.mxu0 0.0
  %259 = vmatpush1.msra.mxu0 0.0
  %260 = vmatprep.subr.mxu0 0.0
  %261 = vmatpush1.msra.mxu0 0.0
  %262 = vmatprep.subr.mxu0 0.0
  %263 = vmatpush1.msra.mxu0 0.0
  %264 = vmatprep.subr.mxu0 0.0
  %265 = vmatpush1.msra.mxu0 0.0
  %266 = vmatprep.subr.mxu0 0.0
  %267 = vmatpush1.msra.mxu0 0.0
  %268 = vmatprep.subr.mxu0 0.0
  %269 = vmatpush1.msra.mxu0 0.0
  %270 = vmatprep.subr.mxu0 0.0
  %271 = vmatpush1.msra.mxu0 0.0
  %272 = vmatprep.subr.mxu0 0.0
  %273 = vmatpush1.msra.mxu0 0.0
  %274 = vmatprep.subr.mxu0 0.0
  %275 = vmatpush1.msra.mxu0 0.0
  %276 = vmatprep.subr.mxu0 0.0
  %277 = vmatpush1.msra.mxu0 0.0
  %278 = vmatprep.subr.mxu0 0.0
  %279 = vmatpush1.msra.mxu0 0.0
  %280 = vmatprep.subr.mxu0 0.0
  %281 = vmatpush1.msra.mxu0 0.0
  %282 = vmatprep.subr.mxu0 0.0
  %283 = vmatpush1.msra.mxu0 0.0
  %284 = vmatprep.subr.mxu0 0.0
  %285 = vmatpush1.msra.mxu0 0.0
  %286 = vmatprep.mubr.f32.mxu0 0.0
  %287 = vmatmul.mubr.f32.gmra.mrb[0].mxu0 %v205
  %v288 = vpop.f32.mrb[0].mxu0
  %v289 = vadd.f32 0.0, %v288
  %v290 = vpop.f32.mrb[0].mxu0
  %291 = vdwg.mxu0
  %vm292 = vcmask 27648
  %293 = vst.msk [vmem:[%s6] sm:$0xf] %vm292, %v289
  // Predicated region
  $region26: #{attention_mlp.1} parent=0 // pred_check
    _
  $region27: #{attention_mlp.1} parent=0 // pred_check_branch
    %295 = sbr.rel (0) target = $region29
  $region28: #{attention_mlp.1} parent=0 // pred_region
    _
  $region29: #{attention_mlp.1} parent=0 // pred_fallthru
    _
  // Predicated region
  $region30: #{attention_mlp.1} parent=0 // pred_check
    _
  $region31: #{attention_mlp.1} parent=0 // pred_check_branch
    %297 = sbr.rel (0) target = $region33
  $region32: #{attention_mlp.1} parent=0 // pred_region
    _
  $region33: #{attention_mlp.1} parent=0 // pred_fallthru
    _

</llo_original>
